<compile_context>
chip_gen: v7x
topology: tpu7x:2x2x1
jax: 0.10.0
libtpu: 0.0.40
codegen_flags: <defaults>
</compile_context>

<pallas_src>
import jax
import jax.numpy as jnp
from jax.experimental import pallas as pl
from jax.experimental.pallas import tpu as pltpu

_LANE = 128
_SUBLANE_BF16 = 16
_MIB = 1024 * 1024


# --------------------------- small helpers ----------------------------------

def _llama_hidden_dim(dim: int, hidden_dim: int, multiple_of: int) -> int:
    hidden_dim = int(2 * hidden_dim / 3)
    hidden_dim = multiple_of * ((hidden_dim + multiple_of - 1) // multiple_of)
    return hidden_dim


def _round_up(x: int, m: int) -> int:
    return ((x + m - 1) // m) * m


def _tpu_vmem_bytes() -> int:
    try:
        return int(pltpu.get_tpu_info().vmem_capacity_bytes)
    except Exception:
        return 64 * _MIB  # conservative default (v7x per-TC VMEM)


def _num_tensorcores(vmem_bytes: int) -> int:
    # v7x is the only generation with 2 TensorCores per chip; it is also the
    # only one exposing 64 MiB (vs 128 MiB) VMEM per core.
    return 2 if vmem_bytes <= 64 * _MIB else 1


def _choose_tn(hidden: int, vmem_bytes: int) -> int:
    # v7x (64 MiB VMEM): use a smaller hidden tile so the row tile tm can grow.
    cap = 256 if vmem_bytes <= 64 * _MIB else 512
    cap = min(cap, _round_up(hidden, _LANE))
    # Prefer a 128-multiple that divides hidden exactly (no padded weight bytes).
    for t in range(cap, _LANE - 1, -_LANE):
        if hidden % t == 0:
            return t
    return cap


def _vmem_footprint(tm: int, tn: int, dim: int, out_bytes: int, w_buffers: int) -> int:
    x_b = 2 * tm * dim * 2                    # activation row tile, 2x buffered, bf16
    w13_b = w_buffers * dim * (2 * tn) * 2    # fused [W1|W3] weight tile(s), bf16
    w2_b = w_buffers * tn * dim * 2           # W2 weight tile(s), bf16
    o_b = 2 * tm * dim * out_bytes            # output row tile, 2x buffered
    acc_b = tm * dim * 4                      # f32 accumulator scratch
    return x_b + w13_b + w2_b + o_b + acc_b


def _choose_tiles(m_rows: int, dim: int, tn: int, n_k: int,
                  out_bytes: int, vmem_bytes: int):
    """Pick (tm, weight_buffer_count, vmem_limit_bytes) for this call's M."""
    num_tc = _num_tensorcores(vmem_bytes)
    budget = int(vmem_bytes * 0.85)
    m16 = _round_up(m_rows, _SUBLANE_BF16)

    if m_rows >= 2048:
        tm = 1024                       # push flops/weight-byte past the roofline
    elif m_rows >= 1024:
        tm = 512
    elif num_tc >= 2 and m_rows >= 2 * _SUBLANE_BF16:
        # v7x: split small M across the two TensorCores.
        tm = _round_up((m_rows + 1) // 2, _SUBLANE_BF16)
    else:
        # Single TC: never split small M -> weights stream through HBM once.
        tm = m16
    tm = min(tm, m16)
    tm = max(tm, _SUBLANE_BF16)

    # Extra weight-tile buffering only pays off when the hidden loop is long.
    w_buffers = 3 if n_k >= 3 else 2
    while True:
        fp = _vmem_footprint(tm, tn, dim, out_bytes, w_buffers)
        if fp <= budget:
            break
        if w_buffers > 2:
            w_buffers = 2
            continue
        if tm > _SUBLANE_BF16:
            tm = max(_SUBLANE_BF16, _round_up(tm // 2, _SUBLANE_BF16))
            continue
        break  # give up shrinking; let the compiler report if it truly can't fit

    fp = _vmem_footprint(tm, tn, dim, out_bytes, w_buffers)
    vmem_limit = max(32 * _MIB, fp + 6 * _MIB)          # footprint + headroom
    vmem_limit = min(vmem_limit, vmem_bytes - 4 * _MIB)  # never over physical
    return tm, w_buffers, int(vmem_limit)


def _weight_block_spec(block_shape, index_map, n_buffers):
    if n_buffers > 2:
        try:
            return pl.BlockSpec(block_shape, index_map,
                                pipeline_mode=pl.Buffered(n_buffers))
        except TypeError:
            pass  # pipeline_mode not supported in this jax version -> default 2
    return pl.BlockSpec(block_shape, index_map)


# ------------------------------- kernel --------------------------------------

def _ffn_kernel(x_ref, w13_ref, w2_ref, o_ref, acc_ref):
    # x_ref  : (tm, dim)    bf16   activation row tile (resident across k)
    # w13_ref: (dim, 2*tn)  bf16   fused [W1_k | W3_k] gate-weight tile
    # w2_ref : (tn, dim)    bf16   hidden tile of W2
    # o_ref  : (tm, dim)           written on the last hidden tile
    # acc_ref: (tm, dim)    f32    VMEM accumulator (resident across k)
    k = pl.program_id(1)
    tn = w2_ref.shape[0]

    x = x_ref[...]
    # One MXU pass produces both x@W1 and x@W3 for this hidden tile.
    h = jnp.dot(x, w13_ref[...], preferred_element_type=jnp.float32)  # (tm, 2*tn)
    h1 = h[:, :tn]
    h3 = h[:, tn:]
    g = (h1 * jax.nn.sigmoid(h1)) * h3            # SiLU gating in f32 (VPU + EUP)
    partial = jnp.dot(g.astype(w2_ref.dtype), w2_ref[...],
                      preferred_element_type=jnp.float32)

    @pl.when(k == 0)
    def _first():
        acc_ref[...] = partial                    # direct write: no zero-init pass

    @pl.when(k > 0)
    def _rest():
        acc_ref[...] += partial

    @pl.when(k == pl.num_programs(1) - 1)
    def _finalize():
        o_ref[...] = acc_ref[...].astype(o_ref.dtype)


# ------------------------------ module wrapper --------------------------------

class FeedForwardPallas:
    """llama2 FeedForward: out = W2( silu(W1 x) * (W3 x) ).

    Weights are given in math layout: w1/w3: (dim, hidden), w2: (hidden, dim)
    so that y = x @ W.  All weight preprocessing happens ONCE in __init__.
    """

    def __init__(self, w1, w3, w2, *, tn=None, weight_dtype=jnp.bfloat16):
        dim, hidden = w1.shape
        assert w3.shape == (dim, hidden) and w2.shape == (hidden, dim)
        self.dim = int(dim)
        self.hidden = int(hidden)
        self.vmem_bytes = _tpu_vmem_bytes()
        self.tn = int(tn) if tn is not None else _choose_tn(hidden, self.vmem_bytes)
        assert self.tn % _LANE == 0

        # ---- one-time weight prep (pad / cast / fuse / per-tile layout) ----
        h_pad = _round_up(hidden, self.tn)
        if h_pad != hidden:
            pad = h_pad - hidden
            # Padded hidden columns are exact: silu(0)*0 = 0 against zero W2 rows.
            w1 = jnp.pad(w1, ((0, 0), (0, pad)))
            w3 = jnp.pad(w3, ((0, 0), (0, pad)))
            w2 = jnp.pad(w2, ((0, pad), (0, 0)))
        self.h_pad = h_pad
        self.n_k = h_pad // self.tn

        w1t = w1.astype(weight_dtype).reshape(dim, self.n_k, self.tn).transpose(1, 0, 2)
        w3t = w3.astype(weight_dtype).reshape(dim, self.n_k, self.tn).transpose(1, 0, 2)
        # (n_k, dim, 2*tn): contiguous per hidden tile -> unit-stride weight DMAs.
        self.w13 = jnp.concatenate([w1t, w3t], axis=2)
        self.w2 = w2.astype(weight_dtype)                 # (h_pad, dim), row tiles

    def __call__(self, x, out_dtype=None):
        batch, seq, dim = x.shape
        assert dim == self.dim
        out_dtype = jnp.dtype(out_dtype) if out_dtype is not None else x.dtype
        M = batch * seq
        out2d = self._call_2d(x.reshape(M, dim), out_dtype)
        return out2d.reshape(batch, seq, dim)

    def _call_2d(self, x2d, out_dtype):
        M, dim = x2d.shape
        tn, n_k = self.tn, self.n_k
        tm, w_buffers, vmem_limit = _choose_tiles(
            M, dim, tn, n_k, jnp.dtype(out_dtype).itemsize, self.vmem_bytes)

        xb = x2d.astype(jnp.bfloat16)
        m_pad = _round_up(M, tm)
        if m_pad != M:
            xb = jnp.pad(xb, ((0, m_pad - M), (0, 0)))
        n_i = m_pad // tm

        w13_spec = _weight_block_spec((None, dim, 2 * tn),
                                      lambda i, k: (k, 0, 0), w_buffers)
        w2_spec = _weight_block_spec((tn, dim), lambda i, k: (k, 0), w_buffers)

        out2d = pl.pallas_call(
            _ffn_kernel,
            out_shape=jax.ShapeDtypeStruct((m_pad, dim), out_dtype),
            grid_spec=pltpu.PrefetchScalarGridSpec(
                num_scalar_prefetch=0,
                grid=(n_i, n_k),                   # hidden (reduction) axis last
                in_specs=[
                    pl.BlockSpec((tm, dim), lambda i, k: (i, 0)),   # x row tile
                    w13_spec,                                       # fused W1|W3 tile
                    w2_spec,                                        # W2 tile
                ],
                out_specs=pl.BlockSpec((tm, dim), lambda i, k: (i, 0)),
                scratch_shapes=[pltpu.VMEM((tm, dim), jnp.float32)],
            ),
            compiler_params=pltpu.CompilerParams(
                dimension_semantics=("parallel", "arbitrary"),
                vmem_limit_bytes=vmem_limit,
            ),
        )(xb, self.w13, self.w2)

        return out2d[:M] if m_pad != M else out2d


# ----------------------------- references -------------------------------------

def feed_forward_ref_f32(x2d, w1, w3, w2):
    h1 = x2d @ w1
    h3 = x2d @ w3
    return (h1 * jax.nn.sigmoid(h1) * h3) @ w2


def feed_forward_ref_bf16(x2d, w1, w3, w2):
    bf = jnp.bfloat16
    xb, w1b, w3b, w2b = (a.astype(bf) for a in (x2d, w1, w3, w2))
    h1 = jnp.dot(xb, w1b, preferred_element_type=jnp.float32)
    h3 = jnp.dot(xb, w3b, preferred_element_type=jnp.float32)
    g = (h1 * jax.nn.sigmoid(h1)) * h3
    return jnp.dot(g.astype(bf), w2b, preferred_element_type=jnp.float32)


# TODO(synk): fp8 (v7x) / int8 (v5e/v6e) weight paths for the decode regime are
# intentionally not implemented here (numerics change, gate behind a flag).

if __name__ == "__main__":
    # Module hyperparameters (small): dim=128, hidden_dim=256, multiple_of=32
    dim = 128
    hidden_dim_arg = 256
    multiple_of = 32
    hidden = _llama_hidden_dim(dim, hidden_dim_arg, multiple_of)   # -> 192

    batch, seq = 2, 8

    key = jax.random.PRNGKey(0)
    kx, k1, k2, k3 = jax.random.split(key, 4)
    x = jax.random.normal(kx, (batch, seq, dim), dtype=jnp.float32)
    # Deterministic Linear(bias=False) weights, stored transposed (math layout).
    w1 = jax.random.normal(k1, (dim, hidden), dtype=jnp.float32) * (1.0 / dim ** 0.5)
    w3 = jax.random.normal(k3, (dim, hidden), dtype=jnp.float32) * (1.0 / dim ** 0.5)
    w2 = jax.random.normal(k2, (hidden, dim), dtype=jnp.float32) * (1.0 / hidden ** 0.5)

    # One-time weight prep (hoisted out of the per-step hot path).  tn=128 pads
    # hidden 192 -> 256 and exercises the 2-step hidden accumulation loop.
    ffn = FeedForwardPallas(w1, w3, w2, tn=128)

    out = jax.block_until_ready(ffn(x))
    assert out.shape == (batch, seq, dim)
    assert out.dtype == x.dtype

    x2d = x.reshape(-1, dim)
    # Tight check against a bf16-matmul / f32-accumulate reference (same math).
    ref_bf16 = feed_forward_ref_bf16(x2d, w1, w3, w2).reshape(batch, seq, dim)
    assert jnp.allclose(out, ref_bf16, atol=1e-2, rtol=1e-2), "mismatch vs bf16 reference"

    # Loose sanity check against the full-f32 reference.
    ref_f32 = feed_forward_ref_f32(x2d, w1, w3, w2).reshape(batch, seq, dim)
    assert jnp.allclose(out, ref_f32, atol=1e-1, rtol=1e-1), "mismatch vs f32 reference"

    # Optional bf16 output path (halves output writeback bytes) also runs.
    out_bf16 = jax.block_until_ready(ffn(x, out_dtype=jnp.bfloat16))
    assert out_bf16.dtype == jnp.bfloat16
    assert jnp.allclose(out_bf16.astype(jnp.float32), ref_bf16, atol=5e-2, rtol=5e-2)

    print("KERNEL_OK")
</pallas_src>

<mosaic_0001>
module attributes {stable_mosaic.version = 11 : i64} {
  func.func @_ffn_kernel(%arg0: i32, %arg1: i32, %arg2: memref<16x128xbf16, #tpu.memory_space<vmem>>, %arg3: memref<1x128x256xbf16, #tpu.memory_space<vmem>>, %arg4: memref<128x128xbf16, #tpu.memory_space<vmem>>, %arg5: memref<16x128xf32, #tpu.memory_space<vmem>>, %arg6: memref<16x128xf32, #tpu.memory_space<vmem>>) attributes {dimension_semantics = [#tpu.dimension_semantics<parallel>, #tpu.dimension_semantics<arbitrary>], iteration_bounds = array<i64: 1, 2>, scalar_prefetch = 0 : i64, scratch_operands = 1 : i64, tpu.core_type = #tpu.core_type<tc>, window_params = [{transform_indices = @transform_0, window_bounds = array<i64: 16, 128>}, {transform_indices = @transform_1, window_bounds = array<i64: 1, 128, 256>}, {transform_indices = @transform_2, window_bounds = array<i64: 128, 128>}, {transform_indices = @transform_3, window_bounds = array<i64: 16, 128>}]} {
    %c0 = arith.constant 0 : index
    %c0_0 = arith.constant 0 : index
    %0 = vector.load %arg2[%c0, %c0_0] : memref<16x128xbf16, #tpu.memory_space<vmem>>, vector<16x128xbf16>
    %c0_1 = arith.constant 0 : index
    %c0_2 = arith.constant 0 : index
    %c0_3 = arith.constant 0 : index
    %1 = vector.load %arg3[%c0_1, %c0_2, %c0_3] : memref<1x128x256xbf16, #tpu.memory_space<vmem>>, vector<1x128x256xbf16>
    %2 = vector.shape_cast %1 : vector<1x128x256xbf16> to vector<128x256xbf16>
    %cst = arith.constant dense<0.000000e+00> : vector<16x256xf32>
    %3 = tpu.matmul %0, %2, %cst {dimension_numbers = #tpu.dot_dimension_numbers<[1], [0], [0], [1], [0, 0, 1, 1], [], []>} : vector<16x128xbf16>, vector<128x256xbf16>, vector<16x256xf32> -> vector<16x256xf32>
    %4 = vector.extract_strided_slice %3 {offsets = [0, 0], sizes = [16, 128], strides = [1, 1]} : vector<16x256xf32> to vector<16x128xf32>
    %5 = vector.extract_strided_slice %3 {offsets = [0, 128], sizes = [16, 128], strides = [1, 1]} : vector<16x256xf32> to vector<16x128xf32>
    %6 = arith.negf %4 : vector<16x128xf32>
    %7 = math.exp %6 : vector<16x128xf32>
    %cst_4 = arith.constant 1.000000e+00 : f32
    %8 = vector.broadcast %cst_4 : f32 to vector<16x128xf32>
    %9 = arith.addf %8, %7 : vector<16x128xf32>
    %10 = arith.divf %8, %9 : vector<16x128xf32>
    %11 = arith.mulf %4, %10 : vector<16x128xf32>
    %12 = arith.mulf %11, %5 : vector<16x128xf32>
    %13 = arith.truncf %12 : vector<16x128xf32> to vector<16x128xbf16>
    %c0_5 = arith.constant 0 : index
    %c0_6 = arith.constant 0 : index
    %14 = vector.load %arg4[%c0_5, %c0_6] : memref<128x128xbf16, #tpu.memory_space<vmem>>, vector<128x128xbf16>
    %cst_7 = arith.constant dense<0.000000e+00> : vector<16x128xf32>
    %15 = tpu.matmul %13, %14, %cst_7 {dimension_numbers = #tpu.dot_dimension_numbers<[1], [0], [0], [1], [0, 0, 1, 1], [], []>} : vector<16x128xbf16>, vector<128x128xbf16>, vector<16x128xf32> -> vector<16x128xf32>
    %c0_i32 = arith.constant 0 : i32
    %16 = arith.cmpi eq, %arg1, %c0_i32 : i32
    %17 = arith.extui %16 : i1 to i32
    %c0_i32_8 = arith.constant 0 : i32
    %18 = arith.cmpi ne, %17, %c0_i32_8 : i32
    scf.if %18 {
      %c0_12 = arith.constant 0 : index
      %c0_13 = arith.constant 0 : index
      %25 = vector.load %arg6[%c0_12, %c0_13] : memref<16x128xf32, #tpu.memory_space<vmem>>, vector<16x128xf32>
      tpu.vector_store %arg6[%c0_12, %c0_13], %15 {strides = array<i32>} : memref<16x128xf32, #tpu.memory_space<vmem>>, vector<16x128xf32>,
    } else {
    }
    %c0_i32_9 = arith.constant 0 : i32
    %19 = arith.cmpi sgt, %arg1, %c0_i32_9 : i32
    %20 = arith.extui %19 : i1 to i32
    %c0_i32_10 = arith.constant 0 : i32
    %21 = arith.cmpi ne, %20, %c0_i32_10 : i32
    scf.if %21 {
      %c0_12 = arith.constant 0 : index
      %c0_13 = arith.constant 0 : index
      %25 = vector.load %arg6[%c0_12, %c0_13] : memref<16x128xf32, #tpu.memory_space<vmem>>, vector<16x128xf32>
      %26 = arith.addf %25, %15 : vector<16x128xf32>
      %c0_14 = arith.constant 0 : index
      %c0_15 = arith.constant 0 : index
      %27 = vector.load %arg6[%c0_14, %c0_15] : memref<16x128xf32, #tpu.memory_space<vmem>>, vector<16x128xf32>
      tpu.vector_store %arg6[%c0_14, %c0_15], %26 {strides = array<i32>} : memref<16x128xf32, #tpu.memory_space<vmem>>, vector<16x128xf32>,
    } else {
    }
    %c1_i32 = arith.constant 1 : i32
    %22 = arith.cmpi eq, %arg1, %c1_i32 : i32
    %23 = arith.extui %22 : i1 to i32
    %c0_i32_11 = arith.constant 0 : i32
    %24 = arith.cmpi ne, %23, %c0_i32_11 : i32
    scf.if %24 {
      %c0_12 = arith.constant 0 : index
      %c0_13 = arith.constant 0 : index
      %25 = vector.load %arg6[%c0_12, %c0_13] : memref<16x128xf32, #tpu.memory_space<vmem>>, vector<16x128xf32>
      %c0_14 = arith.constant 0 : index
      %c0_15 = arith.constant 0 : index
      %26 = vector.load %arg5[%c0_14, %c0_15] : memref<16x128xf32, #tpu.memory_space<vmem>>, vector<16x128xf32>
      tpu.vector_store %arg5[%c0_14, %c0_15], %25 {strides = array<i32>} : memref<16x128xf32, #tpu.memory_space<vmem>>, vector<16x128xf32>,
    } else {
    }
    return
  }
  func.func @transform_0(%arg0: i32, %arg1: i32) -> (i32, i32) {
    %c0_i32 = arith.constant 0 : i32
    %c0_i32_0 = arith.constant 0 : i32
    return %arg0, %c0_i32 : i32, i32
  }
  func.func @transform_1(%arg0: i32, %arg1: i32) -> (i32, i32, i32) {
    %c0_i32 = arith.constant 0 : i32
    %c0_i32_0 = arith.constant 0 : i32
    %c0_i32_1 = arith.constant 0 : i32
    return %arg1, %c0_i32, %c0_i32_0 : i32, i32, i32
  }
  func.func @transform_2(%arg0: i32, %arg1: i32) -> (i32, i32) {
    %c0_i32 = arith.constant 0 : i32
    %c0_i32_0 = arith.constant 0 : i32
    return %arg1, %c0_i32 : i32, i32
  }
  func.func @transform_3(%arg0: i32, %arg1: i32) -> (i32, i32) {
    %c0_i32 = arith.constant 0 : i32
    %c0_i32_0 = arith.constant 0 : i32
    return %arg0, %c0_i32 : i32, i32
  }
}

</mosaic_0001>

<llo_original>
// kernel: tpu_custom_call.1
$region0: #{tpu_custom_call.1}
  #allocation0 [shape = 'u32[]', space=smem, size = 0x4, offset = 0x4, fixed_abs, tag = 'smem constant byte address 0x4 - core index']
  #allocation1 [shape = 'u32[144,128]{1,0:T(1,128)}', space=vmem, size = 0x12000, scoped, tag = 'internal scratch']
  #allocation2 [shape = 'f32[16,128]{1,0:T(8,128)}', space=vmem, size = 0x2000, scoped, tag = 'scratch operand']
  %s0 = inlined_call_operand.hbm [shape: bf16[16,128], index: 0, kind: input, shape index: {}]
  %s1 = inlined_call_operand.hbm [shape: bf16[2,128,256], index: 1, kind: input, shape index: {}]
  %s2 = inlined_call_operand.hbm [shape: bf16[256,128], index: 2, kind: input, shape index: {}]
  %s3 = inlined_call_operand.hbm [shape: f32[16,128], index: 3, kind: output, shape index: {}]
  %s4 = sld [smem:[#allocation0]]
  $region69: #{tpu_custom_call.1} parent=0
    _
  %s6 = ssub.s32 1, %s4
  %s7 = scalar_select 0, %s6, %s4
  $region1: #{tpu_custom_call.1} parent=0
    #allocation3 [shape = 'u8[4096]{0}', space=vmem, size = 0x1000, scoped, tag = 'input window, operand 0, single buffered']
    #allocation4 [shape = 's32[2]{0}', space=sflag, size = 0x8, scoped, tag = 'scoped memory for tpu_custom_call.1']
    #allocation5 [shape = 's32[2]{0}', space=sflag, size = 0x8, scoped, tag = 'scoped memory for tpu_custom_call.1']
    #allocation6 [shape = 'u8[131072]{0}', space=vmem, size = 0x20000, scoped, tag = 'input window, operand 1']
    #allocation7 [shape = 's32[2]{0}', space=sflag, size = 0x8, scoped, tag = 'scoped memory for tpu_custom_call.1']
    #allocation8 [shape = 'u8[65536]{0}', space=vmem, size = 0x10000, scoped, tag = 'input window, operand 2']
    #allocation9 [shape = 'u8[8192]{0}', space=vmem, size = 0x2000, scoped, tag = 'output window, operand 0, single buffered']
    %8 = vsyncpa [#allocation4], 0
    %9 = vsyncpa [#allocation7], 0
    %s10 = scalar_lea.sflag [#allocation7], 1
    %11 = vsyncpa %s10, 0
    %12 = vsyncpa [#allocation5], 0
    loop: start=0, step=1, limit=4
    $region2: #{tpu_custom_call.1} parent=1 // loop_pre_header
      _
    $region3: #{tpu_custom_call.1} parent=1 // loop_header
      %s14 = sphi 0, %s18
      %p15 = scmp.ge.s32.totalorder %s14, 4
      %s21 = sphi 0, %s33
      %s22 = sphi 0, %s29
      %s23 = sphi 0, %s21
      %s24 = sphi 0, %s22
      %s25 = sphi 0, %s23
      %s26 = sphi 0, %s24
      %s36 = sphi 0, %s38
      %s39 = sphi 0, %s36
      %s40 = sphi 0, %s39
      %s56 = sphi 0, %s40
      %s62 = sphi 0, %s64
      %s65 = sphi 0, %s62
      %s66 = sphi 0, %s65
      %s82 = sphi 0, %s66
      %s88 = sphi 0, %s90
      %s91 = sphi 0, %s88
      %s92 = sphi 0, %s91
      %s108 = sphi 0, %s92
      %s114 = sphi 0, %s116
      %s117 = sphi 0, %s114
      %s118 = sphi 0, %s117
      %s134 = sphi 0, %s118
    $region4: #{tpu_custom_call.1} parent=1 // loop_header_branch
      %17 = sbr.rel (%p15) target = $region8
    $region5: #{tpu_custom_call.1} parent=1 // loop_body
      %s19 = ssub.s32 %s14, 1
      %s20 = ssub.s32 %s14, 2
      %s27 = sadd.s32 1, %s22
      %p28 = scmp.ge.s32.totalorder %s27, 2
      %s29 = scalar_select %p28, 0, %s27
      %s30 = sadd.s32 1, %s21
      %s31 = scalar_select %p28, %s30, %s21
      %p32 = scmp.ge.s32.totalorder %s31, 1
      %s33 = scalar_select %p32, 0, %s31
      %s34 = ssub.s32 %s21, %s33
      %p35 = scmp.eq.s32.totalorder %s34, 0
      %s37 = sadd.s32 %s36, 1
      %s38 = scalar_select %p35, %s36, %s37
      %p41 = pneg %p35
      %p42 = scmp.eq.s32.totalorder %s14, 1
      %p43 = por %p41, %p42
      %p44 = scmp.ne.s32.totalorder %s36, %s39
      %p45 = scmp.eq.s32.totalorder %s14, 0
      %p46 = por %p44, %p45
      %p47 = scmp.ne.s32.totalorder %s36, %s39
      %p48 = scmp.eq.s32.totalorder %s19, 1
      %p49 = por %p47, %p48
      %p50 = scmp.ne.s32.totalorder %s39, %s40
      %p51 = scmp.eq.s32.totalorder %s19, 0
      %p52 = por %p50, %p51
      %p53 = scmp.ne.s32.totalorder %s39, %s40
      %p54 = scmp.eq.s32.totalorder %s20, 1
      %p55 = por %p53, %p54
      %p57 = scmp.ne.s32.totalorder %s40, %s56
      %p58 = scmp.eq.s32.totalorder %s20, 0
      %p59 = por %p57, %p58
      %s60 = ssub.s32 %s22, %s29
      %p61 = scmp.eq.s32.totalorder %s60, 0
      %s63 = sadd.s32 %s62, 1
      %s64 = scalar_select %p61, %s62, %s63
      %p67 = pneg %p61
      %p68 = scmp.eq.s32.totalorder %s14, 1
      %p69 = por %p67, %p68
      %p70 = scmp.ne.s32.totalorder %s62, %s65
      %p71 = scmp.eq.s32.totalorder %s14, 0
      %p72 = por %p70, %p71
      %p73 = scmp.ne.s32.totalorder %s62, %s65
      %p74 = scmp.eq.s32.totalorder %s19, 1
      %p75 = por %p73, %p74
      %p76 = scmp.ne.s32.totalorder %s65, %s66
      %p77 = scmp.eq.s32.totalorder %s19, 0
      %p78 = por %p76, %p77
      %p79 = scmp.ne.s32.totalorder %s65, %s66
      %p80 = scmp.eq.s32.totalorder %s20, 1
      %p81 = por %p79, %p80
      %p83 = scmp.ne.s32.totalorder %s66, %s82
      %p84 = scmp.eq.s32.totalorder %s20, 0
      %p85 = por %p83, %p84
      %s86 = ssub.s32 %s22, %s29
      %p87 = scmp.eq.s32.totalorder %s86, 0
      %s89 = sadd.s32 %s88, 1
      %s90 = scalar_select %p87, %s88, %s89
      %p93 = pneg %p87
      %p94 = scmp.eq.s32.totalorder %s14, 1
      %p95 = por %p93, %p94
      %p96 = scmp.ne.s32.totalorder %s88, %s91
      %p97 = scmp.eq.s32.totalorder %s14, 0
      %p98 = por %p96, %p97
      %p99 = scmp.ne.s32.totalorder %s88, %s91
      %p100 = scmp.eq.s32.totalorder %s19, 1
      %p101 = por %p99, %p100
      %p102 = scmp.ne.s32.totalorder %s91, %s92
      %p103 = scmp.eq.s32.totalorder %s19, 0
      %p104 = por %p102, %p103
      %p105 = scmp.ne.s32.totalorder %s91, %s92
      %p106 = scmp.eq.s32.totalorder %s20, 1
      %p107 = por %p105, %p106
      %p109 = scmp.ne.s32.totalorder %s92, %s108
      %p110 = scmp.eq.s32.totalorder %s20, 0
      %p111 = por %p109, %p110
      %s112 = ssub.s32 %s21, %s33
      %p113 = scmp.eq.s32.totalorder %s112, 0
      %s115 = sadd.s32 %s114, 1
      %s116 = scalar_select %p113, %s114, %s115
      %p119 = pneg %p113
      %p120 = scmp.eq.s32.totalorder %s14, 1
      %p121 = por %p119, %p120
      %p122 = scmp.ne.s32.totalorder %s114, %s117
      %p123 = scmp.eq.s32.totalorder %s14, 0
      %p124 = por %p122, %p123
      %p125 = scmp.ne.s32.totalorder %s114, %s117
      %p126 = scmp.eq.s32.totalorder %s19, 1
      %p127 = por %p125, %p126
      %p128 = scmp.ne.s32.totalorder %s117, %s118
      %p129 = scmp.eq.s32.totalorder %s19, 0
      %p130 = por %p128, %p129
      %p131 = scmp.ne.s32.totalorder %s117, %s118
      %p132 = scmp.eq.s32.totalorder %s20, 1
      %p133 = por %p131, %p132
      %p135 = scmp.ne.s32.totalorder %s118, %s134
      %p136 = scmp.eq.s32.totalorder %s20, 0
      %p137 = por %p135, %p136
      %p138 = scmp.le.s32.totalorder 1, %s14
      %p139 = scmp.lt.s32.totalorder %s14, 3
      %p140 = pnand %p138, %p139
      %p141 = pneg %p140
      // Predicated region
      $region9: #{tpu_custom_call.1} parent=5 // pred_check
        _
      $region10: #{tpu_custom_call.1} parent=5 // pred_check_branch
        %143 = sbr.rel (%p140) target = $region12
      $region11: #{tpu_custom_call.1} parent=5 // pred_region
        %s144 = ssub.s32 %s14, 1
        // Predicated region
        $region13: #{tpu_custom_call.1} parent=11 // pred_check
          %p145 = pneg %p52
        $region14: #{tpu_custom_call.1} parent=11 // pred_check_branch
          %147 = sbr.rel (%p145) target = $region16
        $region15: #{tpu_custom_call.1} parent=11 // pred_region
          %s148 = smul.u32 2, %s23
          %s150 = ssub.s32 128, 128
          %151 = vsyncadd [#allocation4], %s150
          %s152 = smul.addr %s148, 64
          %s153 = scalar_lea.hbm %s0, %s152
          %s154 = sshll.u32 [#allocation3], 4
          %s155 = int_to_ptr.vmem [resolvable:$true] %s154
          %160 = dma.hbm_to_vmem [thread:$0]  %s153, 128, %s155, [#allocation4], 64, 64, 4
        $region16: #{tpu_custom_call.1} parent=11 // pred_fallthru
          _
      $region12: #{tpu_custom_call.1} parent=5 // pred_fallthru
        _
      %p161 = scmp.lt.s32.totalorder %s14, 2
      // Predicated region
      $region17: #{tpu_custom_call.1} parent=5 // pred_check
        %p162 = pneg %p161
      $region18: #{tpu_custom_call.1} parent=5 // pred_check_branch
        %164 = sbr.rel (%p162) target = $region20
      $region19: #{tpu_custom_call.1} parent=5 // pred_region
        // Predicated region
        $region21: #{tpu_custom_call.1} parent=19 // pred_check
          %p165 = pneg %p72
        $region22: #{tpu_custom_call.1} parent=19 // pred_check_branch
          %167 = sbr.rel (%p165) target = $region24
        $region23: #{tpu_custom_call.1} parent=19 // pred_region
          %s168 = sand.u32 %s14, 1
          %s169 = scalar_lea.sflag [#allocation7], %s168
          %s170 = sand.u32 %s62, 1
          %s171 = smul.addr %s170, 128
          %s172 = scalar_lea.vmem [#allocation6], %s171
          %s174 = ssub.s32 2048, 2048
          %175 = vsyncadd %s169, %s174
          %s176 = smul.addr %s22, 32
          %s177 = smul.addr %s176, 64
          %s178 = scalar_lea.hbm %s1, %s177
          %s179 = sshll.u32 %s172, 4
          %s180 = int_to_ptr.vmem [resolvable:$true] %s179
          %185 = dma.hbm_to_vmem [thread:$0]  %s178, 2048, %s180, %s169, 128, 128, 8
        $region24: #{tpu_custom_call.1} parent=19 // pred_fallthru
          _
        // Predicated region
        $region25: #{tpu_custom_call.1} parent=19 // pred_check
          %p186 = pneg %p98
        $region26: #{tpu_custom_call.1} parent=19 // pred_check_branch
          %188 = sbr.rel (%p186) target = $region28
        $region27: #{tpu_custom_call.1} parent=19 // pred_region
          %s189 = sand.u32 %s14, 1
          %s190 = scalar_lea.sflag [#allocation7], %s189
          %s191 = sand.u32 %s88, 1
          %s192 = smul.addr %s191, 64
          %s193 = scalar_lea.vmem [#allocation8], %s192
          %s194 = smul.u32 16, %s22
          %s196 = ssub.s32 1024, 1024
          %197 = vsyncadd %s190, %s196
          %s198 = smul.addr %s194, 64
          %s199 = scalar_lea.hbm %s2, %s198
          %s200 = sshll.u32 %s193, 4
          %s201 = int_to_ptr.vmem [resolvable:$true] %s200
          %206 = dma.hbm_to_vmem [thread:$0]  %s199, 1024, %s201, %s190, 64, 64, 4
        $region28: #{tpu_custom_call.1} parent=19 // pred_fallthru
          _
      $region20: #{tpu_custom_call.1} parent=5 // pred_fallthru
        _
      %p207 = scmp.le.s32.totalorder 1, %s14
      %p208 = scmp.lt.s32.totalorder %s14, 3
      %p209 = pnand %p207, %p208
      %p210 = pneg %p209
      // Predicated region
      $region29: #{tpu_custom_call.1} parent=5 // pred_check
        _
      $region30: #{tpu_custom_call.1} parent=5 // pred_check_branch
        %212 = sbr.rel (%p209) target = $region32
      $region31: #{tpu_custom_call.1} parent=5 // pred_region
        %s213 = ssub.s32 %s14, 1
        // Predicated region
        $region33: #{tpu_custom_call.1} parent=31 // pred_check
          %p214 = pneg %p52
        $region34: #{tpu_custom_call.1} parent=31 // pred_check_branch
          %216 = sbr.rel (%p214) target = $region36
        $region35: #{tpu_custom_call.1} parent=31 // pred_region
          %217 = dma.done [#allocation4], 128
        $region36: #{tpu_custom_call.1} parent=31 // pred_fallthru
          _
        %s218 = sand.u32 %s19, 1
        %s219 = scalar_lea.sflag [#allocation7], %s218
        %s220 = sand.u32 %s65, 1
        %s221 = smul.addr %s220, 128
        %s222 = scalar_lea.vmem [#allocation6], %s221
        // Predicated region
        $region37: #{tpu_custom_call.1} parent=31 // pred_check
          %p223 = pneg %p78
        $region38: #{tpu_custom_call.1} parent=31 // pred_check_branch
          %225 = sbr.rel (%p223) target = $region40
        $region39: #{tpu_custom_call.1} parent=31 // pred_region
          %226 = dma.done %s219, 2048
        $region40: #{tpu_custom_call.1} parent=31 // pred_fallthru
          _
        %s227 = sand.u32 %s19, 1
        %s228 = scalar_lea.sflag [#allocation7], %s227
        %s229 = sand.u32 %s91, 1
        %s230 = smul.addr %s229, 64
        %s231 = scalar_lea.vmem [#allocation8], %s230
        // Predicated region
        $region41: #{tpu_custom_call.1} parent=31 // pred_check
          %p232 = pneg %p104
        $region42: #{tpu_custom_call.1} parent=31 // pred_check_branch
          %234 = sbr.rel (%p232) target = $region44
        $region43: #{tpu_custom_call.1} parent=31 // pred_region
          %235 = dma.done %s228, 1024
        $region44: #{tpu_custom_call.1} parent=31 // pred_fallthru
          _
        %p236 = pneg %p52
        %p237 = pneg %p49
        %s238 = sand.u32 %s19, 1
        %s239 = scalar_lea.sflag [#allocation7], %s238
        %s240 = sand.u32 %s65, 1
        %s241 = smul.addr %s240, 128
        %s242 = scalar_lea.vmem [#allocation6], %s241
        %p243 = pneg %p78
        %p244 = pneg %p75
        %s245 = sand.u32 %s19, 1
        %s246 = scalar_lea.sflag [#allocation7], %s245
        %s247 = sand.u32 %s91, 1
        %s248 = smul.addr %s247, 64
        %s249 = scalar_lea.vmem [#allocation8], %s248
        %p250 = pneg %p104
        %p251 = pneg %p101
        %p252 = pneg %p130
        %p253 = pneg %p127
        %s254 = smul.u32 2, %s23
        %s255 = smul.u32 16, %s24
        %s256 = smul.u32 2, %s23
        %v258 = vld [vmem:[#allocation3] sm:$0xf]
        %v259 = vld [vmem:[#allocation3 + $0x4] sm:$0xf]
        %v260 = vld [vmem:[%s222] sm:$0xff]
        %v261 = vld [vmem:[%s222 + $0x8] sm:$0xff]
        %v262 = vld [vmem:[%s222 + $0x10] sm:$0xff]
        %v263 = vld [vmem:[%s222 + $0x18] sm:$0xff]
        %v264 = vld [vmem:[%s222 + $0x20] sm:$0xff]
        %v265 = vld [vmem:[%s222 + $0x28] sm:$0xff]
        %v266 = vld [vmem:[%s222 + $0x30] sm:$0xff]
        %v267 = vld [vmem:[%s222 + $0x38] sm:$0xff]
        %v268 = vld [vmem:[%s222 + $0x40] sm:$0xff]
        %v269 = vld [vmem:[%s222 + $0x48] sm:$0xff]
        %v270 = vld [vmem:[%s222 + $0x50] sm:$0xff]
        %v271 = vld [vmem:[%s222 + $0x58] sm:$0xff]
        %v272 = vld [vmem:[%s222 + $0x60] sm:$0xff]
        %v273 = vld [vmem:[%s222 + $0x68] sm:$0xff]
        %v274 = vld [vmem:[%s222 + $0x70] sm:$0xff]
        %v275 = vld [vmem:[%s222 + $0x78] sm:$0xff]
        %v278 = vunpack.c.l.b16 %v258
        %v279 = vunpack.c.l.b16 %v259
        %v280 = vpack.c.b16 %v279, %v278
        %v298 = vunpack.c.l.b16 %v260
        %v299 = vunpack.c.h.b16 %v260
        %v300 = vunpack.c.l.b16 %v261
        %v301 = vunpack.c.h.b16 %v261
        %v302 = vunpack.c.l.b16 %v262
        %v303 = vunpack.c.h.b16 %v262
        %v304 = vunpack.c.l.b16 %v263
        %v305 = vunpack.c.h.b16 %v263
        %v306 = vunpack.c.l.b16 %v264
        %v307 = vunpack.c.h.b16 %v264
        %v308 = vunpack.c.l.b16 %v265
        %v309 = vunpack.c.h.b16 %v265
        %v310 = vunpack.c.l.b16 %v266
        %v311 = vunpack.c.h.b16 %v266
        %v312 = vunpack.c.l.b16 %v267
        %v313 = vunpack.c.h.b16 %v267
        %v314 = vunpack.c.l.b16 %v268
        %v315 = vunpack.c.h.b16 %v268
        %v316 = vunpack.c.l.b16 %v269
        %v317 = vunpack.c.h.b16 %v269
        %v318 = vunpack.c.l.b16 %v270
        %v319 = vunpack.c.h.b16 %v270
        %v320 = vunpack.c.l.b16 %v271
        %v321 = vunpack.c.h.b16 %v271
        %v322 = vunpack.c.l.b16 %v272
        %v323 = vunpack.c.h.b16 %v272
        %v324 = vunpack.c.l.b16 %v273
        %v325 = vunpack.c.h.b16 %v273
        %v326 = vunpack.c.l.b16 %v274
        %v327 = vunpack.c.h.b16 %v274
        %v328 = vunpack.c.l.b16 %v275
        %v329 = vunpack.c.h.b16 %v275
        %v330 = vpack.c.b16 %v300, %v298
        %v331 = vpack.c.b16 %v301, %v299
        %v332 = vpack.c.b16 %v304, %v302
        %v333 = vpack.c.b16 %v305, %v303
        %v334 = vpack.c.b16 %v308, %v306
        %v335 = vpack.c.b16 %v309, %v307
        %v336 = vpack.c.b16 %v312, %v310
        %v337 = vpack.c.b16 %v313, %v311
        %v338 = vpack.c.b16 %v316, %v314
        %v339 = vpack.c.b16 %v317, %v315
        %v340 = vpack.c.b16 %v320, %v318
        %v341 = vpack.c.b16 %v321, %v319
        %v342 = vpack.c.b16 %v324, %v322
        %v343 = vpack.c.b16 %v325, %v323
        %v344 = vpack.c.b16 %v328, %v326
        %v345 = vpack.c.b16 %v329, %v327
        %362 = vmatprep.subr.bf16.mxu0 %v331
        %363 = vmatpush1.bf16.msra.mxu0 %v330
        %364 = vmatprep.subr.bf16.mxu0 %v333
        %365 = vmatpush1.bf16.msra.mxu0 %v332
        %366 = vmatprep.subr.bf16.mxu0 %v335
        %367 = vmatpush1.bf16.msra.mxu0 %v334
        %368 = vmatprep.subr.bf16.mxu0 %v337
        %369 = vmatpush1.bf16.msra.mxu0 %v336
        %370 = vmatprep.subr.bf16.mxu0 %v339
        %371 = vmatpush1.bf16.msra.mxu0 %v338
        %372 = vmatprep.subr.bf16.mxu0 %v341
        %373 = vmatpush1.bf16.msra.mxu0 %v340
        %374 = vmatprep.subr.bf16.mxu0 %v343
        %375 = vmatpush1.bf16.msra.mxu0 %v342
        %376 = vmatprep.subr.bf16.mxu0 %v345
        %377 = vmatpush1.bf16.msra.mxu0 %v344
        %378 = vmatprep.subr.bf16.mxu0 0
        %379 = vmatpush1.bf16.msra.mxu0 0
        %380 = vmatprep.subr.bf16.mxu0 0
        %381 = vmatpush1.bf16.msra.mxu0 0
        %382 = vmatprep.subr.bf16.mxu0 0
        %383 = vmatpush1.bf16.msra.mxu0 0
        %384 = vmatprep.subr.bf16.mxu0 0
        %385 = vmatpush1.bf16.msra.mxu0 0
        %386 = vmatprep.subr.bf16.mxu0 0
        %387 = vmatpush1.bf16.msra.mxu0 0
        %388 = vmatprep.subr.bf16.mxu0 0
        %389 = vmatpush1.bf16.msra.mxu0 0
        %390 = vmatprep.subr.bf16.mxu0 0
        %391 = vmatpush1.bf16.msra.mxu0 0
        %392 = vmatprep.subr.bf16.mxu0 0
        %393 = vmatpush1.bf16.msra.mxu0 0
        %394 = vmatprep.mubr.bf16.mxu0 0
        %395 = vmatmul.mubr.bf16.gmra.mrb[0].mxu0 %v280
        %v396 = vpop.f32.mrb[0].mxu0
        %v397 = vadd.f32 0.0, %v396
        %v398 = vpop.f32.mrb[0].mxu0
        %v399 = vadd.f32 0.0, %v398
        %v400 = vpop.f32.mrb[0].mxu0
        %v401 = vadd.f32 0.0, %v400
        %v402 = vpop.f32.mrb[0].mxu0
        %v403 = vadd.f32 0.0, %v402
        %404 = vdwg.mxu0
        %v405 = vxor.u32 %v397, 2147483648
        %v406 = vxor.u32 %v401, 2147483648
        %v407 = vmul.f32 %v405, 1.442695
        %v408 = vpow.pop %v407
        %v409 = vmul.f32 %v406, 1.442695
        %v410 = vpow.pop %v409
        %v411 = vadd.f32 %v408, 1.0
        %v412 = vadd.f32 %v410, 1.0
        %v413 = vrcp.pop %v411
        %v414 = vmul.f32 1.0, %v413
        %v415 = vrcp.pop %v412
        %v416 = vmul.f32 1.0, %v415
        %v417 = vmul.f32 %v397, %v414
        %v418 = vmul.f32 %v401, %v416
        %v419 = vmul.f32 %v417, %v399
        %v420 = vmul.f32 %v418, %v403
        %v421 = vpack.c.bf16 %v420, %v419
        %v422 = vld [vmem:[%s231] sm:$0xf]
        %v423 = vld [vmem:[%s231 + $0x4] sm:$0xf]
        %v424 = vld [vmem:[%s231 + $0x8] sm:$0xf]
        %v425 = vld [vmem:[%s231 + $0xc] sm:$0xf]
        %v426 = vld [vmem:[%s231 + $0x10] sm:$0xf]
        %v427 = vld [vmem:[%s231 + $0x14] sm:$0xf]
        %v428 = vld [vmem:[%s231 + $0x18] sm:$0xf]
        %v429 = vld [vmem:[%s231 + $0x1c] sm:$0xf]
        %v430 = vld [vmem:[%s231 + $0x20] sm:$0xf]
        %v431 = vld [vmem:[%s231 + $0x24] sm:$0xf]
        %v432 = vld [vmem:[%s231 + $0x28] sm:$0xf]
        %v433 = vld [vmem:[%s231 + $0x2c] sm:$0xf]
        %v434 = vld [vmem:[%s231 + $0x30] sm:$0xf]
        %v435 = vld [vmem:[%s231 + $0x34] sm:$0xf]
        %v436 = vld [vmem:[%s231 + $0x38] sm:$0xf]
        %v437 = vld [vmem:[%s231 + $0x3c] sm:$0xf]
        %v454 = vunpack.c.l.b16 %v422
        %v455 = vunpack.c.l.b16 %v423
        %v456 = vunpack.c.l.b16 %v424
        %v457 = vunpack.c.l.b16 %v425
        %v458 = vunpack.c.l.b16 %v426
        %v459 = vunpack.c.l.b16 %v427
        %v460 = vunpack.c.l.b16 %v428
        %v461 = vunpack.c.l.b16 %v429
        %v462 = vunpack.c.l.b16 %v430
        %v463 = vunpack.c.l.b16 %v431
        %v464 = vunpack.c.l.b16 %v432
        %v465 = vunpack.c.l.b16 %v433
        %v466 = vunpack.c.l.b16 %v434
        %v467 = vunpack.c.l.b16 %v435
        %v468 = vunpack.c.l.b16 %v436
        %v469 = vunpack.c.l.b16 %v437
        %v470 = vpack.c.b16 %v455, %v454
        %v471 = vpack.c.b16 %v457, %v456
        %v472 = vpack.c.b16 %v459, %v458
        %v473 = vpack.c.b16 %v461, %v460
        %v474 = vpack.c.b16 %v463, %v462
        %v475 = vpack.c.b16 %v465, %v464
        %v476 = vpack.c.b16 %v467, %v466
        %v477 = vpack.c.b16 %v469, %v468
        %486 = vmatprep.subr.bf16.mxu0 0
        %487 = vmatpush1.bf16.msra.mxu0 %v470
        %488 = vmatprep.subr.bf16.mxu0 0
        %489 = vmatpush1.bf16.msra.mxu0 %v471
        %490 = vmatprep.subr.bf16.mxu0 0
        %491 = vmatpush1.bf16.msra.mxu0 %v472
        %492 = vmatprep.subr.bf16.mxu0 0
        %493 = vmatpush1.bf16.msra.mxu0 %v473
        %494 = vmatprep.subr.bf16.mxu0 0
        %495 = vmatpush1.bf16.msra.mxu0 %v474
        %496 = vmatprep.subr.bf16.mxu0 0
        %497 = vmatpush1.bf16.msra.mxu0 %v475
        %498 = vmatprep.subr.bf16.mxu0 0
        %499 = vmatpush1.bf16.msra.mxu0 %v476
        %500 = vmatprep.subr.bf16.mxu0 0
        %501 = vmatpush1.bf16.msra.mxu0 %v477
        %502 = vmatprep.subr.bf16.mxu0 0
        %503 = vmatpush1.bf16.msra.mxu0 0
        %504 = vmatprep.subr.bf16.mxu0 0
        %505 = vmatpush1.bf16.msra.mxu0 0
        %506 = vmatprep.subr.bf16.mxu0 0
        %507 = vmatpush1.bf16.msra.mxu0 0
        %508 = vmatprep.subr.bf16.mxu0 0
        %509 = vmatpush1.bf16.msra.mxu0 0
        %510 = vmatprep.subr.bf16.mxu0 0
        %511 = vmatpush1.bf16.msra.mxu0 0
        %512 = vmatprep.subr.bf16.mxu0 0
        %513 = vmatpush1.bf16.msra.mxu0 0
        %514 = vmatprep.subr.bf16.mxu0 0
        %515 = vmatpush1.bf16.msra.mxu0 0
        %516 = vmatprep.subr.bf16.mxu0 0
        %517 = vmatpush1.bf16.msra.mxu0 0
        %518 = vmatprep.mubr.bf16.mxu0 0
        %519 = vmatmul.mubr.bf16.gmra.mrb[0].mxu0 %v421
        %v520 = vpop.f32.mrb[0].mxu0
        %v521 = vadd.f32 0.0, %v520
        %v522 = vpop.f32.mrb[0].mxu0
        %v523 = vpop.f32.mrb[0].mxu0
        %v524 = vadd.f32 0.0, %v523
        %v525 = vpop.f32.mrb[0].mxu0
        %526 = vdwg.mxu0
        %p527 = scmp.eq.s32.totalorder %s24, 0
        // Predicated region
        $region45: #{tpu_custom_call.1} parent=31 // pred_check
          %p528 = pneg %p527
        $region46: #{tpu_custom_call.1} parent=31 // pred_check_branch
          %530 = sbr.rel (%p528) target = $region48
        $region47: #{tpu_custom_call.1} parent=31 // pred_region
          %531 = vst [vmem:[#allocation2] sm:$0xff] %v521
          %532 = vst [vmem:[#allocation2 + $0x8] sm:$0xff] %v524
        $region48: #{tpu_custom_call.1} parent=31 // pred_fallthru
          _
        %p533 = scmp.gt.s32.totalorder %s24, 0
        // Predicated region
        $region49: #{tpu_custom_call.1} parent=31 // pred_check
          %p534 = pneg %p533
        $region50: #{tpu_custom_call.1} parent=31 // pred_check_branch
          %536 = sbr.rel (%p534) target = $region52
        $region51: #{tpu_custom_call.1} parent=31 // pred_region
          %v537 = vld [vmem:[#allocation2] sm:$0xff]
          %v538 = vld [vmem:[#allocation2 + $0x8] sm:$0xff]
          %v539 = vadd.f32 %v537, %v521
          %v540 = vadd.f32 %v538, %v524
          %541 = vst [vmem:[#allocation2] sm:$0xff] %v539
          %542 = vst [vmem:[#allocation2 + $0x8] sm:$0xff] %v540
        $region52: #{tpu_custom_call.1} parent=31 // pred_fallthru
          _
        %p543 = scmp.eq.s32.totalorder %s24, 1
        // Predicated region
        $region53: #{tpu_custom_call.1} parent=31 // pred_check
          %p544 = pneg %p543
        $region54: #{tpu_custom_call.1} parent=31 // pred_check_branch
          %546 = sbr.rel (%p544) target = $region56
        $region55: #{tpu_custom_call.1} parent=31 // pred_region
          %v547 = vld [vmem:[#allocation2] sm:$0xff]
          %v548 = vld [vmem:[#allocation2 + $0x8] sm:$0xff]
          %549 = vst [vmem:[#allocation9] sm:$0xff] %v547
          %550 = vst [vmem:[#allocation9 + $0x8] sm:$0xff] %v548
        $region56: #{tpu_custom_call.1} parent=31 // pred_fallthru
          _
        // Predicated region
        $region57: #{tpu_custom_call.1} parent=31 // pred_check
          %p551 = pneg %p127
        $region58: #{tpu_custom_call.1} parent=31 // pred_check_branch
          %553 = sbr.rel (%p551) target = $region60
        $region59: #{tpu_custom_call.1} parent=31 // pred_region
          %s554 = smul.u32 2, %s23
          %s556 = ssub.s32 256, 256
          %557 = vsyncadd [#allocation5], %s556
          %s558 = smul.addr %s554, 128
          %s559 = scalar_lea.hbm %s3, %s558
          %s560 = sshll.u32 [#allocation9], 4
          %s561 = int_to_ptr.vmem [resolvable:$true] %s560
          %566 = dma.vmem_to_hbm [thread:$0]  %s561, 256, %s559, [#allocation5], 128, 128, 8
        $region60: #{tpu_custom_call.1} parent=31 // pred_fallthru
          _
        // Predicated region
        $region61: #{tpu_custom_call.1} parent=31 // pred_check
          %p567 = pneg %p127
        $region62: #{tpu_custom_call.1} parent=31 // pred_check_branch
          %569 = sbr.rel (%p567) target = $region64
        $region63: #{tpu_custom_call.1} parent=31 // pred_region
          %570 = dma.done [#allocation5], 256
        $region64: #{tpu_custom_call.1} parent=31 // pred_fallthru
          _
      $region32: #{tpu_custom_call.1} parent=5 // pred_fallthru
        _
      %p571 = scmp.le.s32.totalorder 2, %s14
      // Predicated region
      $region65: #{tpu_custom_call.1} parent=5 // pred_check
        %p572 = pneg %p571
      $region66: #{tpu_custom_call.1} parent=5 // pred_check_branch
        %574 = sbr.rel (%p572) target = $region68
      $region67: #{tpu_custom_call.1} parent=5 // pred_region
        %s575 = ssub.s32 %s14, 2
      $region68: #{tpu_custom_call.1} parent=5 // pred_fallthru
        _
    $region6: #{tpu_custom_call.1} parent=1 // loop_footer
      %s18 = sadd.s32 1, %s14
    $region7: #{tpu_custom_call.1} parent=1 // loop_footer_branch
      %13 = sbr.rel target = $region3
    $region8: #{tpu_custom_call.1} parent=1 // loop_exit
      _
    %576 = vsyncpa [#allocation4], 1
    %s577 = scalar_lea.sflag [#allocation4], 1
    %578 = vsyncpa %s577, 1
    %579 = vsyncpa [#allocation7], 1
    %s580 = scalar_lea.sflag [#allocation7], 1
    %581 = vsyncpa %s580, 1
    %582 = vsyncpa [#allocation5], 1
    %s583 = scalar_lea.sflag [#allocation5], 1
    %584 = vsyncpa %s583, 1

</llo_original>
